<compile_context>
chip_gen: v6e
topology: v6e:2x2x1
jax: 0.10.0
libtpu: 0.0.40
codegen_flags: <defaults>
</compile_context>

<pallas_src>
import jax
import jax.numpy as jnp
from jax.experimental import pallas as pl
from jax.experimental.pallas import tpu as pltpu


def _gcn_kernel(x_ref, w_ref, b_ref, adj_ref, o_ref):
    # x_ref:   (BTh, N, Din)   all (b, t) slices of this block
    # w_ref:   (Din, Dout)
    # b_ref:   (1, Dout)
    # adj_ref: (N, N)
    # o_ref:   (BTh, N, Dout)
    bth, n, din = x_ref.shape
    dout = w_ref.shape[1]

    adj = adj_ref[...]                                        # (N, N)

    # --- Graph aggregation first (cheaper: Din < Dout) --------------------
    # adj @ (x w + b) == (adj @ x) @ w + rowsum(adj)[:, None] * b
    adj_b = jnp.broadcast_to(adj, (bth, n, n))
    agg = jnp.einsum('bmn,bnd->bmd', adj_b, x_ref[...],
                     preferred_element_type=jnp.float32)      # (BTh, N, Din)

    # --- Feature projection: single 2-D MXU matmul over the whole block ---
    # (BTh, N, Din) -> (BTh*N, Din) merges leading dims only (minor dim kept),
    # so it is a relayout-free vreg re-indexing.
    h = jnp.dot(agg.reshape(bth * n, din), w_ref[...],
                preferred_element_type=jnp.float32)           # (BTh*N, Dout)
    h = h.reshape(bth, n, dout)                               # split back, minor-preserving

    # --- Bias pushed through the aggregation -------------------------------
    deg = jnp.sum(adj, axis=1, keepdims=True)                 # (N, 1), XLU reduce
    h = h + (deg * b_ref[...])[None]                          # (1, N, Dout) broadcast add

    # --- Activation + store -------------------------------------------------
    o_ref[...] = jnp.maximum(h, 0.0).astype(o_ref.dtype)


def gcn_forward(x, adj, w, b):
    """x: (B, T, N, Din) f32, adj: (N, N), w: (Din, Dout), b: (Dout,)."""
    B, T, N, Din = x.shape
    Dout = w.shape[1]
    BT = B * T

    # Two grid steps along a "parallel" axis so both v7x TensorCores get work;
    # each step's working set is a few tens of KiB (far below VMEM limits).
    BTh = BT // 2 if BT % 2 == 0 else BT
    grid = (BT // BTh,)

    x3 = x.reshape(BT, N, Din)          # free reshape: (b, t) collapsed
    b2d = b.reshape(1, Dout)

    out3 = pl.pallas_call(
        _gcn_kernel,
        out_shape=jax.ShapeDtypeStruct((BT, N, Dout), x.dtype),
        grid=grid,
        in_specs=[
            pl.BlockSpec((BTh, N, Din), lambda i: (i, 0, 0)),
            pl.BlockSpec((Din, Dout), lambda i: (0, 0)),    # grid-invariant
            pl.BlockSpec((1, Dout), lambda i: (0, 0)),      # grid-invariant
            pl.BlockSpec((N, N), lambda i: (0, 0)),         # grid-invariant
        ],
        out_specs=pl.BlockSpec((BTh, N, Dout), lambda i: (i, 0, 0)),
        compiler_params=pltpu.CompilerParams(
            dimension_semantics=("parallel",)),
    )(x3, w, b2d, adj)

    return out3.reshape(B, T, N, Dout)


def gcn_reference(x, adj, w, b):
    h = jnp.einsum('abcd,de->abce', x, w) + b
    h = jnp.matmul(adj, h)
    return jnp.maximum(h, 0.0)


if __name__ == "__main__":
    key = jax.random.PRNGKey(0)
    kx, kadj, kw, kb = jax.random.split(key, 4)

    # Small shapes consistent with the module's forward.
    B, T, N = 2, 4, 16          # batch, seq, num_nodes
    in_dim, out_dim = 8, 32

    x = jax.random.normal(kx, (B, T, N, in_dim), dtype=jnp.float32)
    adj = jax.random.normal(kadj, (N, N), dtype=jnp.float32)
    w = jax.random.normal(kw, (in_dim, out_dim), dtype=jnp.float32)
    # Learnable bias: nonzero so the bias path is actually verified.
    b = 0.1 * jax.random.normal(kb, (out_dim,), dtype=jnp.float32)

    out = jax.block_until_ready(gcn_forward(x, adj, w, b))
    ref = gcn_reference(x, adj, w, b)

    assert out.shape == (B, T, N, out_dim)
    assert jnp.allclose(out, ref, atol=1e-4, rtol=1e-4), "mismatch vs reference"

    print("KERNEL_OK")
</pallas_src>

<mosaic_0001>
module attributes {stable_mosaic.version = 11 : i64} {
  func.func @_gcn_kernel(%arg0: i32, %arg1: memref<4x16x8xf32, #tpu.memory_space<vmem>>, %arg2: memref<8x32xf32, #tpu.memory_space<vmem>>, %arg3: memref<1x32xf32, #tpu.memory_space<vmem>>, %arg4: memref<16x16xf32, #tpu.memory_space<vmem>>, %arg5: memref<4x16x32xf32, #tpu.memory_space<vmem>>) attributes {dimension_semantics = [#tpu.dimension_semantics<parallel>], iteration_bounds = array<i64: 2>, scalar_prefetch = 0 : i64, scratch_operands = 0 : i64, tpu.core_type = #tpu.core_type<tc>, window_params = [{transform_indices = @transform_0, window_bounds = array<i64: 4, 16, 8>}, {pipeline_mode = #tpu.pipeline_mode<synchronous>, transform_indices = @transform_1, window_bounds = array<i64: 8, 32>}, {pipeline_mode = #tpu.pipeline_mode<synchronous>, transform_indices = @transform_2, window_bounds = array<i64: 1, 32>}, {pipeline_mode = #tpu.pipeline_mode<synchronous>, transform_indices = @transform_3, window_bounds = array<i64: 16, 16>}, {transform_indices = @transform_4, window_bounds = array<i64: 4, 16, 32>}]} {
    %c0 = arith.constant 0 : index
    %c0_0 = arith.constant 0 : index
    %0 = vector.load %arg4[%c0, %c0_0] : memref<16x16xf32, #tpu.memory_space<vmem>>, vector<16x16xf32>
    %1 = vector.shape_cast %0 : vector<16x16xf32> to vector<1x16x16xf32>
    %2 = vector.broadcast %1 : vector<1x16x16xf32> to vector<4x16x16xf32>
    %c0_1 = arith.constant 0 : index
    %c0_2 = arith.constant 0 : index
    %c0_3 = arith.constant 0 : index
    %3 = vector.load %arg1[%c0_1, %c0_2, %c0_3] : memref<4x16x8xf32, #tpu.memory_space<vmem>>, vector<4x16x8xf32>
    "tpu.trace_start"() <{level = 10 : i32, message = "bmn,bnd->bmd"}> : () -> ()
    %cst = arith.constant dense<0.000000e+00> : vector<4x16x8xf32>
    %4 = tpu.matmul %2, %3, %cst {dimension_numbers = #tpu.dot_dimension_numbers<[2], [1], [1], [2], [0, 0, 0, 1, 1, 2], [0], [0]>} : vector<4x16x16xf32>, vector<4x16x8xf32>, vector<4x16x8xf32> -> vector<4x16x8xf32>
    "tpu.trace_stop"() : () -> ()
    %5 = vector.shape_cast %4 : vector<4x16x8xf32> to vector<64x8xf32>
    %c0_4 = arith.constant 0 : index
    %c0_5 = arith.constant 0 : index
    %6 = vector.load %arg2[%c0_4, %c0_5] : memref<8x32xf32, #tpu.memory_space<vmem>>, vector<8x32xf32>
    %cst_6 = arith.constant dense<0.000000e+00> : vector<64x32xf32>
    %7 = tpu.matmul %5, %6, %cst_6 {dimension_numbers = #tpu.dot_dimension_numbers<[1], [0], [0], [1], [0, 0, 1, 1], [], []>} : vector<64x8xf32>, vector<8x32xf32>, vector<64x32xf32> -> vector<64x32xf32>
    %8 = vector.shape_cast %7 : vector<64x32xf32> to vector<4x16x32xf32>
    %cst_7 = arith.constant dense<0.000000e+00> : vector<16xf32>
    %9 = vector.multi_reduction <add>, %0, %cst_7 [1] : vector<16x16xf32> to vector<16xf32>
    %10 = vector.shape_cast %9 : vector<16xf32> to vector<16x1xf32>
    %c0_8 = arith.constant 0 : index
    %c0_9 = arith.constant 0 : index
    %11 = vector.load %arg3[%c0_8, %c0_9] : memref<1x32xf32, #tpu.memory_space<vmem>>, vector<1x32xf32>
    %12 = vector.broadcast %10 : vector<16x1xf32> to vector<16x32xf32>
    %13 = vector.broadcast %11 : vector<1x32xf32> to vector<16x32xf32>
    %14 = arith.mulf %12, %13 : vector<16x32xf32>
    %15 = vector.shape_cast %14 : vector<16x32xf32> to vector<1x16x32xf32>
    %16 = vector.broadcast %15 : vector<1x16x32xf32> to vector<4x16x32xf32>
    %17 = arith.addf %8, %16 : vector<4x16x32xf32>
    %cst_10 = arith.constant 0.000000e+00 : f32
    %18 = vector.broadcast %cst_10 : f32 to vector<4x16x32xf32>
    %19 = arith.maximumf %17, %18 : vector<4x16x32xf32>
    %c0_11 = arith.constant 0 : index
    %c0_12 = arith.constant 0 : index
    %c0_13 = arith.constant 0 : index
    %20 = vector.load %arg5[%c0_11, %c0_12, %c0_13] : memref<4x16x32xf32, #tpu.memory_space<vmem>>, vector<4x16x32xf32>
    tpu.vector_store %arg5[%c0_11, %c0_12, %c0_13], %19 {strides = array<i32>} : memref<4x16x32xf32, #tpu.memory_space<vmem>>, vector<4x16x32xf32>,
    return
  }
  func.func @transform_0(%arg0: i32) -> (i32, i32, i32) {
    %c0_i32 = arith.constant 0 : i32
    %c0_i32_0 = arith.constant 0 : i32
    %c0_i32_1 = arith.constant 0 : i32
    return %arg0, %c0_i32, %c0_i32_0 : i32, i32, i32
  }
  func.func @transform_1(%arg0: i32) -> (i32, i32) {
    %c0_i32 = arith.constant 0 : i32
    %c0_i32_0 = arith.constant 0 : i32
    %c0_i32_1 = arith.constant 0 : i32
    return %c0_i32, %c0_i32_0 : i32, i32
  }
  func.func @transform_2(%arg0: i32) -> (i32, i32) {
    %c0_i32 = arith.constant 0 : i32
    %c0_i32_0 = arith.constant 0 : i32
    %c0_i32_1 = arith.constant 0 : i32
    return %c0_i32, %c0_i32_0 : i32, i32
  }
  func.func @transform_3(%arg0: i32) -> (i32, i32) {
    %c0_i32 = arith.constant 0 : i32
    %c0_i32_0 = arith.constant 0 : i32
    %c0_i32_1 = arith.constant 0 : i32
    return %c0_i32, %c0_i32_0 : i32, i32
  }
  func.func @transform_4(%arg0: i32) -> (i32, i32, i32) {
    %c0_i32 = arith.constant 0 : i32
    %c0_i32_0 = arith.constant 0 : i32
    %c0_i32_1 = arith.constant 0 : i32
    return %arg0, %c0_i32, %c0_i32_0 : i32, i32, i32
  }
}

</mosaic_0001>

<llo_original>
// kernel: tpu_custom_call.1
$region0: #{tpu_custom_call.1}
  #allocation0 [shape = 'u32[]', space=smem, size = 0x4, offset = 0x4, fixed_abs, tag = 'smem constant byte address 0x4 - core index']
  #allocation1 [shape = 'u32[144,128]{1,0:T(1,128)}', space=vmem, size = 0x12000, scoped, tag = 'internal scratch']
  %s0 = inlined_call_operand.vmem [shape: f32[8,16,8], index: 0, kind: input, shape index: {}]
  %s1 = inlined_call_operand.vmem [shape: f32[8,32], index: 1, kind: input, shape index: {}]
  %s2 = inlined_call_operand.vmem [shape: f32[1,32], index: 2, kind: input, shape index: {}]
  %s3 = inlined_call_operand.vmem [shape: f32[16,16], index: 3, kind: input, shape index: {}]
  %s4 = inlined_call_operand.hbm [shape: f32[8,16,32], index: 4, kind: output, shape index: {}]
  %s5 = sld [smem:[#allocation0]]
  $region49: #{tpu_custom_call.1} parent=0
    _
  %s7 = ssub.s32 1, %s5
  %s8 = scalar_select 0, %s7, %s5
  $region1: #{tpu_custom_call.1} parent=0
    #allocation2 [shape = 'u8[65536]{0}', space=vmem, size = 0x10000, scoped, tag = 'output window, operand 0']
    #allocation3 [shape = 's32[2]{0}', space=sflag, size = 0x8, scoped, tag = 'scoped memory for tpu_custom_call.1']
    %9 = vsyncpa [#allocation3], 0
    %s10 = scalar_lea.sflag [#allocation3], 1
    %11 = vsyncpa %s10, 0
    loop: start=0, step=1, limit=4
    $region2: #{tpu_custom_call.1} parent=1 // loop_pre_header
      _
    $region3: #{tpu_custom_call.1} parent=1 // loop_header
      %s13 = sphi 0, %s17
      %p14 = scmp.ge.s32.totalorder %s13, 4
      %s23 = sphi 0, %s25
      %s26 = sphi 0, %s23
      %s27 = sphi 0, %s26
      %s43 = sphi 0, %s27
      %s47 = sphi 0, %s47
      %s49 = sphi 0, %s47
      %s50 = sphi 0, %s49
      %s64 = sphi 0, %s50
      %s68 = sphi 0, %s68
      %s70 = sphi 0, %s68
      %s71 = sphi 0, %s70
      %s85 = sphi 0, %s71
      %s89 = sphi 0, %s89
      %s91 = sphi 0, %s89
      %s92 = sphi 0, %s91
      %s106 = sphi 0, %s92
      %s112 = sphi 0, %s114
      %s115 = sphi 0, %s112
      %s116 = sphi 0, %s115
      %s132 = sphi 0, %s116
    $region4: #{tpu_custom_call.1} parent=1 // loop_header_branch
      %16 = sbr.rel (%p14) target = $region8
    $region5: #{tpu_custom_call.1} parent=1 // loop_body
      %s18 = ssub.s32 %s13, 1
      %s19 = ssub.s32 %s13, 2
      %s20 = sadd.s32 %s13, 1
      %s21 = ssub.s32 %s13, %s20
      %p22 = scmp.eq.s32.totalorder %s21, 0
      %s24 = sadd.s32 %s23, 1
      %s25 = scalar_select %p22, %s23, %s24
      %p28 = pneg %p22
      %p29 = scmp.eq.s32.totalorder %s13, 1
      %p30 = por %p28, %p29
      %p31 = scmp.ne.s32.totalorder %s23, %s26
      %p32 = scmp.eq.s32.totalorder %s13, 0
      %p33 = por %p31, %p32
      %p34 = scmp.ne.s32.totalorder %s23, %s26
      %p35 = scmp.eq.s32.totalorder %s18, 1
      %p36 = por %p34, %p35
      %p37 = scmp.ne.s32.totalorder %s26, %s27
      %p38 = scmp.eq.s32.totalorder %s18, 0
      %p39 = por %p37, %p38
      %p40 = scmp.ne.s32.totalorder %s26, %s27
      %p41 = scmp.eq.s32.totalorder %s19, 1
      %p42 = por %p40, %p41
      %p44 = scmp.ne.s32.totalorder %s27, %s43
      %p45 = scmp.eq.s32.totalorder %s19, 0
      %p46 = por %p44, %p45
      %s48 = sadd.s32 %s47, 1
      %p51 = scmp.eq.s32.totalorder %s13, 1
      %p52 = scmp.ne.s32.totalorder %s47, %s49
      %p53 = scmp.eq.s32.totalorder %s13, 0
      %p54 = por %p52, %p53
      %p55 = scmp.ne.s32.totalorder %s47, %s49
      %p56 = scmp.eq.s32.totalorder %s18, 1
      %p57 = por %p55, %p56
      %p58 = scmp.ne.s32.totalorder %s49, %s50
      %p59 = scmp.eq.s32.totalorder %s18, 0
      %p60 = por %p58, %p59
      %p61 = scmp.ne.s32.totalorder %s49, %s50
      %p62 = scmp.eq.s32.totalorder %s19, 1
      %p63 = por %p61, %p62
      %p65 = scmp.ne.s32.totalorder %s50, %s64
      %p66 = scmp.eq.s32.totalorder %s19, 0
      %p67 = por %p65, %p66
      %s69 = sadd.s32 %s68, 1
      %p72 = scmp.eq.s32.totalorder %s13, 1
      %p73 = scmp.ne.s32.totalorder %s68, %s70
      %p74 = scmp.eq.s32.totalorder %s13, 0
      %p75 = por %p73, %p74
      %p76 = scmp.ne.s32.totalorder %s68, %s70
      %p77 = scmp.eq.s32.totalorder %s18, 1
      %p78 = por %p76, %p77
      %p79 = scmp.ne.s32.totalorder %s70, %s71
      %p80 = scmp.eq.s32.totalorder %s18, 0
      %p81 = por %p79, %p80
      %p82 = scmp.ne.s32.totalorder %s70, %s71
      %p83 = scmp.eq.s32.totalorder %s19, 1
      %p84 = por %p82, %p83
      %p86 = scmp.ne.s32.totalorder %s71, %s85
      %p87 = scmp.eq.s32.totalorder %s19, 0
      %p88 = por %p86, %p87
      %s90 = sadd.s32 %s89, 1
      %p93 = scmp.eq.s32.totalorder %s13, 1
      %p94 = scmp.ne.s32.totalorder %s89, %s91
      %p95 = scmp.eq.s32.totalorder %s13, 0
      %p96 = por %p94, %p95
      %p97 = scmp.ne.s32.totalorder %s89, %s91
      %p98 = scmp.eq.s32.totalorder %s18, 1
      %p99 = por %p97, %p98
      %p100 = scmp.ne.s32.totalorder %s91, %s92
      %p101 = scmp.eq.s32.totalorder %s18, 0
      %p102 = por %p100, %p101
      %p103 = scmp.ne.s32.totalorder %s91, %s92
      %p104 = scmp.eq.s32.totalorder %s19, 1
      %p105 = por %p103, %p104
      %p107 = scmp.ne.s32.totalorder %s92, %s106
      %p108 = scmp.eq.s32.totalorder %s19, 0
      %p109 = por %p107, %p108
      %s110 = ssub.s32 %s13, %s20
      %p111 = scmp.eq.s32.totalorder %s110, 0
      %s113 = sadd.s32 %s112, 1
      %s114 = scalar_select %p111, %s112, %s113
      %p117 = pneg %p111
      %p118 = scmp.eq.s32.totalorder %s13, 1
      %p119 = por %p117, %p118
      %p120 = scmp.ne.s32.totalorder %s112, %s115
      %p121 = scmp.eq.s32.totalorder %s13, 0
      %p122 = por %p120, %p121
      %p123 = scmp.ne.s32.totalorder %s112, %s115
      %p124 = scmp.eq.s32.totalorder %s18, 1
      %p125 = por %p123, %p124
      %p126 = scmp.ne.s32.totalorder %s115, %s116
      %p127 = scmp.eq.s32.totalorder %s18, 0
      %p128 = por %p126, %p127
      %p129 = scmp.ne.s32.totalorder %s115, %s116
      %p130 = scmp.eq.s32.totalorder %s19, 1
      %p131 = por %p129, %p130
      %p133 = scmp.ne.s32.totalorder %s116, %s132
      %p134 = scmp.eq.s32.totalorder %s19, 0
      %p135 = por %p133, %p134
      %p136 = scmp.le.s32.totalorder 1, %s13
      %p137 = scmp.lt.s32.totalorder %s13, 3
      %p138 = pnand %p136, %p137
      %p139 = pneg %p138
      // Predicated region
      $region9: #{tpu_custom_call.1} parent=5 // pred_check
        _
      $region10: #{tpu_custom_call.1} parent=5 // pred_check_branch
        %141 = sbr.rel (%p138) target = $region12
      $region11: #{tpu_custom_call.1} parent=5 // pred_region
        %s142 = ssub.s32 %s13, 1
        // Predicated region
        $region13: #{tpu_custom_call.1} parent=11 // pred_check
          %p143 = pneg %p60
        $region14: #{tpu_custom_call.1} parent=11 // pred_check_branch
          %145 = sbr.rel (%p143) target = $region16
        $region15: #{tpu_custom_call.1} parent=11 // pred_region
          _
        $region16: #{tpu_custom_call.1} parent=11 // pred_fallthru
          _
        // Predicated region
        $region17: #{tpu_custom_call.1} parent=11 // pred_check
          %p146 = pneg %p81
        $region18: #{tpu_custom_call.1} parent=11 // pred_check_branch
          %148 = sbr.rel (%p146) target = $region20
        $region19: #{tpu_custom_call.1} parent=11 // pred_region
          _
        $region20: #{tpu_custom_call.1} parent=11 // pred_fallthru
          _
        // Predicated region
        $region21: #{tpu_custom_call.1} parent=11 // pred_check
          %p149 = pneg %p102
        $region22: #{tpu_custom_call.1} parent=11 // pred_check_branch
          %151 = sbr.rel (%p149) target = $region24
        $region23: #{tpu_custom_call.1} parent=11 // pred_region
          _
        $region24: #{tpu_custom_call.1} parent=11 // pred_fallthru
          _
      $region12: #{tpu_custom_call.1} parent=5 // pred_fallthru
        _
      %p152 = scmp.lt.s32.totalorder %s13, 2
      // Predicated region
      $region25: #{tpu_custom_call.1} parent=5 // pred_check
        %p153 = pneg %p152
      $region26: #{tpu_custom_call.1} parent=5 // pred_check_branch
        %155 = sbr.rel (%p153) target = $region28
      $region27: #{tpu_custom_call.1} parent=5 // pred_region
        // Predicated region
        $region29: #{tpu_custom_call.1} parent=27 // pred_check
          %p156 = pneg %p33
        $region30: #{tpu_custom_call.1} parent=27 // pred_check_branch
          %158 = sbr.rel (%p156) target = $region32
        $region31: #{tpu_custom_call.1} parent=27 // pred_region
          %s159 = smul.u32 4, %s13
          %p160 = scmp.lt.s32.totalorder %s159, 7
          %s161 = scalar_select %p160, %s159, 7
          %s162 = smul.addr %s161, 2
          %s163 = smul.addr %s162, 8
          %s164 = scalar_lea.vmem %s0, %s163
          %s165 = smul.u32 4, %s13
        $region32: #{tpu_custom_call.1} parent=27 // pred_fallthru
          _
      $region28: #{tpu_custom_call.1} parent=5 // pred_fallthru
        _
      %p166 = scmp.le.s32.totalorder 1, %s13
      %p167 = scmp.lt.s32.totalorder %s13, 3
      %p168 = pnand %p166, %p167
      %p169 = pneg %p168
      // Predicated region
      $region33: #{tpu_custom_call.1} parent=5 // pred_check
        _
      $region34: #{tpu_custom_call.1} parent=5 // pred_check_branch
        %171 = sbr.rel (%p168) target = $region36
      $region35: #{tpu_custom_call.1} parent=5 // pred_region
        %s172 = ssub.s32 %s13, 1
        %s173 = smul.u32 4, %s18
        %p174 = scmp.lt.s32.totalorder %s173, 7
        %s175 = scalar_select %p174, %s173, 7
        %s176 = smul.addr %s175, 2
        %s177 = smul.addr %s176, 8
        %s178 = scalar_lea.vmem %s0, %s177
        %p179 = pneg %p39
        %p180 = pneg %p36
        %p181 = pneg %p60
        %p182 = pneg %p57
        %p183 = pneg %p81
        %p184 = pneg %p78
        %p185 = pneg %p102
        %p186 = pneg %p99
        %p187 = pneg %p128
        %p188 = pneg %p125
        %s189 = sand.u32 %s115, 1
        %s190 = scalar_lea.sflag [#allocation3], %s189
        %s191 = sand.u32 %s115, 1
        %s192 = smul.addr %s191, 64
        %s193 = scalar_lea.vmem [#allocation2], %s192
        %s194 = smul.u32 4, %s18
        %p195 = scmp.lt.s32.totalorder %s194, 7
        %s196 = scalar_select %p195, %s194, 7
        %s197 = smul.addr %s196, 2
        %s198 = smul.addr %s197, 8
        %s199 = scalar_lea.vmem %s0, %s198
        %s200 = smul.u32 4, %s18
        %s201 = smul.u32 4, %s18
        %v202 = vld [vmem:[%s3] sm:$0xff]
        %v203 = vld [vmem:[%s3 + $0x8] sm:$0xff]
        %v204 = vld [vmem:[%s199] sm:$0xff]
        %v205 = vld [vmem:[%s199 + $0x8] sm:$0xff]
        %v206 = vld [vmem:[%s199 + $0x10] sm:$0xff]
        %v207 = vld [vmem:[%s199 + $0x18] sm:$0xff]
        %v208 = vld [vmem:[%s199 + $0x20] sm:$0xff]
        %v209 = vld [vmem:[%s199 + $0x28] sm:$0xff]
        %v210 = vld [vmem:[%s199 + $0x30] sm:$0xff]
        %v211 = vld [vmem:[%s199 + $0x38] sm:$0xff]
        %vm212 = vcmask 130048
        %v214 = vsel %vm212, %v202, 0
        %v217 = vsel %vm212, %v203, 0
        %219 = vmatprep.subr.mxu0 0.0
        %220 = vmatpush1.msra.mxu0 0.0
        %221 = vmatprep.subr.mxu0 0.0
        %222 = vmatpush1.msra.mxu0 0.0
        %223 = vmatprep.subr.mxu0 0.0
        %224 = vmatpush1.msra.mxu0 0.0
        %225 = vmatprep.subr.mxu0 0.0
        %226 = vmatpush1.msra.mxu0 0.0
        %227 = vmatprep.subr.mxu0 0.0
        %228 = vmatpush1.msra.mxu0 0.0
        %229 = vmatprep.subr.mxu0 0.0
        %230 = vmatpush1.msra.mxu0 0.0
        %231 = vmatprep.subr.mxu0 0.0
        %232 = vmatpush1.msra.mxu0 0.0
        %233 = vmatprep.subr.mxu0 0.0
        %234 = vmatpush1.msra.mxu0 0.0
        %235 = vmatprep.subr.mxu0 0.0
        %236 = vmatpush1.msra.mxu0 0.0
        %237 = vmatprep.subr.mxu0 0.0
        %238 = vmatpush1.msra.mxu0 0.0
        %239 = vmatprep.subr.mxu0 0.0
        %240 = vmatpush1.msra.mxu0 0.0
        %241 = vmatprep.subr.mxu0 0.0
        %242 = vmatpush1.msra.mxu0 0.0
        %243 = vmatprep.subr.mxu0 0.0
        %244 = vmatpush1.msra.mxu0 0.0
        %245 = vmatprep.subr.mxu0 0.0
        %246 = vmatpush1.msra.mxu0 0.0
        %247 = vmatprep.subr.mxu0 0.0
        %248 = vmatpush1.msra.mxu0 %v205
        %249 = vmatprep.subr.mxu0 0.0
        %250 = vmatpush1.msra.mxu0 %v204
        %251 = vmatprep.subr.mxu0 0.0
        %252 = vmatpush2.msra.mxu0 0.0
        %253 = vmatprep.subr.mxu0 0.0
        %254 = vmatpush2.msra.mxu0 0.0
        %255 = vmatprep.subr.mxu0 0.0
        %256 = vmatpush2.msra.mxu0 0.0
        %257 = vmatprep.subr.mxu0 0.0
        %258 = vmatpush2.msra.mxu0 0.0
        %259 = vmatprep.subr.mxu0 0.0
        %260 = vmatpush2.msra.mxu0 0.0
        %261 = vmatprep.subr.mxu0 0.0
        %262 = vmatpush2.msra.mxu0 0.0
        %263 = vmatprep.subr.mxu0 0.0
        %264 = vmatpush2.msra.mxu0 0.0
        %265 = vmatprep.subr.mxu0 0.0
        %266 = vmatpush2.msra.mxu0 0.0
        %267 = vmatprep.subr.mxu0 0.0
        %268 = vmatpush2.msra.mxu0 0.0
        %269 = vmatprep.subr.mxu0 0.0
        %270 = vmatpush2.msra.mxu0 0.0
        %271 = vmatprep.subr.mxu0 0.0
        %272 = vmatpush2.msra.mxu0 0.0
        %273 = vmatprep.subr.mxu0 0.0
        %274 = vmatpush2.msra.mxu0 0.0
        %275 = vmatprep.subr.mxu0 0.0
        %276 = vmatpush2.msra.mxu0 0.0
        %277 = vmatprep.subr.mxu0 0.0
        %278 = vmatpush2.msra.mxu0 0.0
        %279 = vmatprep.subr.mxu0 0.0
        %280 = vmatpush2.msra.mxu0 0.0
        %281 = vmatprep.subr.mxu0 0.0
        %282 = vmatpush2.msra.mxu0 0.0
        %283 = vmatprep.mubr.f32.mxu0 0.0
        %284 = vmatmul.mubr.f32.gmra.mxu0 %v214
        %v285 = vpop.f32.mrf.mxu0
        %v286 = vadd.f32 0.0, %v285
        %v287 = vpop.f32.mrf.mxu0
        %288 = vmatprep.mubr.f32.mxu0 0.0
        %289 = vmatmul.mubr.f32.gmra.mxu0 %v217
        %v290 = vpop.f32.mrf.mxu0
        %v291 = vadd.f32 0.0, %v290
        %v292 = vpop.f32.mrf.mxu0
        %293 = vdwg.mxu0
        %294 = vmatprep.subr.mxu0 0.0
        %295 = vmatpush1.msra.mxu0 0.0
        %296 = vmatprep.subr.mxu0 0.0
        %297 = vmatpush1.msra.mxu0 0.0
        %298 = vmatprep.subr.mxu0 0.0
        %299 = vmatpush1.msra.mxu0 0.0
        %300 = vmatprep.subr.mxu0 0.0
        %301 = vmatpush1.msra.mxu0 0.0
        %302 = vmatprep.subr.mxu0 0.0
        %303 = vmatpush1.msra.mxu0 0.0
        %304 = vmatprep.subr.mxu0 0.0
        %305 = vmatpush1.msra.mxu0 0.0
        %306 = vmatprep.subr.mxu0 0.0
        %307 = vmatpush1.msra.mxu0 0.0
        %308 = vmatprep.subr.mxu0 0.0
        %309 = vmatpush1.msra.mxu0 0.0
        %310 = vmatprep.subr.mxu0 0.0
        %311 = vmatpush1.msra.mxu0 0.0
        %312 = vmatprep.subr.mxu0 0.0
        %313 = vmatpush1.msra.mxu0 0.0
        %314 = vmatprep.subr.mxu0 0.0
        %315 = vmatpush1.msra.mxu0 0.0
        %316 = vmatprep.subr.mxu0 0.0
        %317 = vmatpush1.msra.mxu0 0.0
        %318 = vmatprep.subr.mxu0 0.0
        %319 = vmatpush1.msra.mxu0 0.0
        %320 = vmatprep.subr.mxu0 0.0
        %321 = vmatpush1.msra.mxu0 0.0
        %322 = vmatprep.subr.mxu0 0.0
        %323 = vmatpush1.msra.mxu0 %v207
        %324 = vmatprep.subr.mxu0 0.0
        %325 = vmatpush1.msra.mxu0 %v206
        %326 = vmatprep.subr.mxu0 0.0
        %327 = vmatpush2.msra.mxu0 0.0
        %328 = vmatprep.subr.mxu0 0.0
        %329 = vmatpush2.msra.mxu0 0.0
        %330 = vmatprep.subr.mxu0 0.0
        %331 = vmatpush2.msra.mxu0 0.0
        %332 = vmatprep.subr.mxu0 0.0
        %333 = vmatpush2.msra.mxu0 0.0
        %334 = vmatprep.subr.mxu0 0.0
        %335 = vmatpush2.msra.mxu0 0.0
        %336 = vmatprep.subr.mxu0 0.0
        %337 = vmatpush2.msra.mxu0 0.0
        %338 = vmatprep.subr.mxu0 0.0
        %339 = vmatpush2.msra.mxu0 0.0
        %340 = vmatprep.subr.mxu0 0.0
        %341 = vmatpush2.msra.mxu0 0.0
        %342 = vmatprep.subr.mxu0 0.0
        %343 = vmatpush2.msra.mxu0 0.0
        %344 = vmatprep.subr.mxu0 0.0
        %345 = vmatpush2.msra.mxu0 0.0
        %346 = vmatprep.subr.mxu0 0.0
        %347 = vmatpush2.msra.mxu0 0.0
        %348 = vmatprep.subr.mxu0 0.0
        %349 = vmatpush2.msra.mxu0 0.0
        %350 = vmatprep.subr.mxu0 0.0
        %351 = vmatpush2.msra.mxu0 0.0
        %352 = vmatprep.subr.mxu0 0.0
        %353 = vmatpush2.msra.mxu0 0.0
        %354 = vmatprep.subr.mxu0 0.0
        %355 = vmatpush2.msra.mxu0 0.0
        %356 = vmatprep.subr.mxu0 0.0
        %357 = vmatpush2.msra.mxu0 0.0
        %358 = vmatprep.mubr.f32.mxu0 0.0
        %359 = vmatmul.mubr.f32.gmra.mxu0 %v214
        %v360 = vpop.f32.mrf.mxu0
        %v361 = vadd.f32 0.0, %v360
        %v362 = vpop.f32.mrf.mxu0
        %363 = vmatprep.mubr.f32.mxu0 0.0
        %364 = vmatmul.mubr.f32.gmra.mxu0 %v217
        %v365 = vpop.f32.mrf.mxu0
        %v366 = vadd.f32 0.0, %v365
        %v367 = vpop.f32.mrf.mxu0
        %368 = vdwg.mxu0
        %369 = vmatprep.subr.mxu0 0.0
        %370 = vmatpush1.msra.mxu0 0.0
        %371 = vmatprep.subr.mxu0 0.0
        %372 = vmatpush1.msra.mxu0 0.0
        %373 = vmatprep.subr.mxu0 0.0
        %374 = vmatpush1.msra.mxu0 0.0
        %375 = vmatprep.subr.mxu0 0.0
        %376 = vmatpush1.msra.mxu0 0.0
        %377 = vmatprep.subr.mxu0 0.0
        %378 = vmatpush1.msra.mxu0 0.0
        %379 = vmatprep.subr.mxu0 0.0
        %380 = vmatpush1.msra.mxu0 0.0
        %381 = vmatprep.subr.mxu0 0.0
        %382 = vmatpush1.msra.mxu0 0.0
        %383 = vmatprep.subr.mxu0 0.0
        %384 = vmatpush1.msra.mxu0 0.0
        %385 = vmatprep.subr.mxu0 0.0
        %386 = vmatpush1.msra.mxu0 0.0
        %387 = vmatprep.subr.mxu0 0.0
        %388 = vmatpush1.msra.mxu0 0.0
        %389 = vmatprep.subr.mxu0 0.0
        %390 = vmatpush1.msra.mxu0 0.0
        %391 = vmatprep.subr.mxu0 0.0
        %392 = vmatpush1.msra.mxu0 0.0
        %393 = vmatprep.subr.mxu0 0.0
        %394 = vmatpush1.msra.mxu0 0.0
        %395 = vmatprep.subr.mxu0 0.0
        %396 = vmatpush1.msra.mxu0 0.0
        %397 = vmatprep.subr.mxu0 0.0
        %398 = vmatpush1.msra.mxu0 %v209
        %399 = vmatprep.subr.mxu0 0.0
        %400 = vmatpush1.msra.mxu0 %v208
        %401 = vmatprep.subr.mxu0 0.0
        %402 = vmatpush2.msra.mxu0 0.0
        %403 = vmatprep.subr.mxu0 0.0
        %404 = vmatpush2.msra.mxu0 0.0
        %405 = vmatprep.subr.mxu0 0.0
        %406 = vmatpush2.msra.mxu0 0.0
        %407 = vmatprep.subr.mxu0 0.0
        %408 = vmatpush2.msra.mxu0 0.0
        %409 = vmatprep.subr.mxu0 0.0
        %410 = vmatpush2.msra.mxu0 0.0
        %411 = vmatprep.subr.mxu0 0.0
        %412 = vmatpush2.msra.mxu0 0.0
        %413 = vmatprep.subr.mxu0 0.0
        %414 = vmatpush2.msra.mxu0 0.0
        %415 = vmatprep.subr.mxu0 0.0
        %416 = vmatpush2.msra.mxu0 0.0
        %417 = vmatprep.subr.mxu0 0.0
        %418 = vmatpush2.msra.mxu0 0.0
        %419 = vmatprep.subr.mxu0 0.0
        %420 = vmatpush2.msra.mxu0 0.0
        %421 = vmatprep.subr.mxu0 0.0
        %422 = vmatpush2.msra.mxu0 0.0
        %423 = vmatprep.subr.mxu0 0.0
        %424 = vmatpush2.msra.mxu0 0.0
        %425 = vmatprep.subr.mxu0 0.0
        %426 = vmatpush2.msra.mxu0 0.0
        %427 = vmatprep.subr.mxu0 0.0
        %428 = vmatpush2.msra.mxu0 0.0
        %429 = vmatprep.subr.mxu0 0.0
        %430 = vmatpush2.msra.mxu0 0.0
        %431 = vmatprep.subr.mxu0 0.0
        %432 = vmatpush2.msra.mxu0 0.0
        %433 = vmatprep.mubr.f32.mxu0 0.0
        %434 = vmatmul.mubr.f32.gmra.mxu0 %v214
        %v435 = vpop.f32.mrf.mxu0
        %v436 = vadd.f32 0.0, %v435
        %v437 = vpop.f32.mrf.mxu0
        %438 = vmatprep.mubr.f32.mxu0 0.0
        %439 = vmatmul.mubr.f32.gmra.mxu0 %v217
        %v440 = vpop.f32.mrf.mxu0
        %v441 = vadd.f32 0.0, %v440
        %v442 = vpop.f32.mrf.mxu0
        %443 = vdwg.mxu0
        %444 = vmatprep.subr.mxu0 0.0
        %445 = vmatpush1.msra.mxu0 0.0
        %446 = vmatprep.subr.mxu0 0.0
        %447 = vmatpush1.msra.mxu0 0.0
        %448 = vmatprep.subr.mxu0 0.0
        %449 = vmatpush1.msra.mxu0 0.0
        %450 = vmatprep.subr.mxu0 0.0
        %451 = vmatpush1.msra.mxu0 0.0
        %452 = vmatprep.subr.mxu0 0.0
        %453 = vmatpush1.msra.mxu0 0.0
        %454 = vmatprep.subr.mxu0 0.0
        %455 = vmatpush1.msra.mxu0 0.0
        %456 = vmatprep.subr.mxu0 0.0
        %457 = vmatpush1.msra.mxu0 0.0
        %458 = vmatprep.subr.mxu0 0.0
        %459 = vmatpush1.msra.mxu0 0.0
        %460 = vmatprep.subr.mxu0 0.0
        %461 = vmatpush1.msra.mxu0 0.0
        %462 = vmatprep.subr.mxu0 0.0
        %463 = vmatpush1.msra.mxu0 0.0
        %464 = vmatprep.subr.mxu0 0.0
        %465 = vmatpush1.msra.mxu0 0.0
        %466 = vmatprep.subr.mxu0 0.0
        %467 = vmatpush1.msra.mxu0 0.0
        %468 = vmatprep.subr.mxu0 0.0
        %469 = vmatpush1.msra.mxu0 0.0
        %470 = vmatprep.subr.mxu0 0.0
        %471 = vmatpush1.msra.mxu0 0.0
        %472 = vmatprep.subr.mxu0 0.0
        %473 = vmatpush1.msra.mxu0 %v211
        %474 = vmatprep.subr.mxu0 0.0
        %475 = vmatpush1.msra.mxu0 %v210
        %476 = vmatprep.subr.mxu0 0.0
        %477 = vmatpush2.msra.mxu0 0.0
        %478 = vmatprep.subr.mxu0 0.0
        %479 = vmatpush2.msra.mxu0 0.0
        %480 = vmatprep.subr.mxu0 0.0
        %481 = vmatpush2.msra.mxu0 0.0
        %482 = vmatprep.subr.mxu0 0.0
        %483 = vmatpush2.msra.mxu0 0.0
        %484 = vmatprep.subr.mxu0 0.0
        %485 = vmatpush2.msra.mxu0 0.0
        %486 = vmatprep.subr.mxu0 0.0
        %487 = vmatpush2.msra.mxu0 0.0
        %488 = vmatprep.subr.mxu0 0.0
        %489 = vmatpush2.msra.mxu0 0.0
        %490 = vmatprep.subr.mxu0 0.0
        %491 = vmatpush2.msra.mxu0 0.0
        %492 = vmatprep.subr.mxu0 0.0
        %493 = vmatpush2.msra.mxu0 0.0
        %494 = vmatprep.subr.mxu0 0.0
        %495 = vmatpush2.msra.mxu0 0.0
        %496 = vmatprep.subr.mxu0 0.0
        %497 = vmatpush2.msra.mxu0 0.0
        %498 = vmatprep.subr.mxu0 0.0
        %499 = vmatpush2.msra.mxu0 0.0
        %500 = vmatprep.subr.mxu0 0.0
        %501 = vmatpush2.msra.mxu0 0.0
        %502 = vmatprep.subr.mxu0 0.0
        %503 = vmatpush2.msra.mxu0 0.0
        %504 = vmatprep.subr.mxu0 0.0
        %505 = vmatpush2.msra.mxu0 0.0
        %506 = vmatprep.subr.mxu0 0.0
        %507 = vmatpush2.msra.mxu0 0.0
        %508 = vmatprep.mubr.f32.mxu0 0.0
        %509 = vmatmul.mubr.f32.gmra.mxu0 %v214
        %v510 = vpop.f32.mrf.mxu0
        %v511 = vadd.f32 0.0, %v510
        %v512 = vpop.f32.mrf.mxu0
        %513 = vmatprep.mubr.f32.mxu0 0.0
        %514 = vmatmul.mubr.f32.gmra.mxu0 %v217
        %v515 = vpop.f32.mrf.mxu0
        %v516 = vadd.f32 0.0, %v515
        %v517 = vpop.f32.mrf.mxu0
        %518 = vdwg.mxu0
        %v519 = vld [vmem:[%s1] sm:$0xff]
        %vm520 = vcmask 64512
        %v522 = vsel %vm520, %v286, 0
        %v525 = vsel %vm520, %v291, 0
        %v528 = vsel %vm520, %v361, 0
        %v531 = vsel %vm520, %v366, 0
        %v534 = vsel %vm520, %v436, 0
        %v537 = vsel %vm520, %v441, 0
        %v540 = vsel %vm520, %v511, 0
        %v543 = vsel %vm520, %v516, 0
        %545 = vmatprep.subr.mxu0 0.0
        %546 = vmatpush1.msra.mxu0 0.0
        %547 = vmatprep.subr.mxu0 0.0
        %548 = vmatpush1.msra.mxu0 0.0
        %549 = vmatprep.subr.mxu0 0.0
        %550 = vmatpush1.msra.mxu0 0.0
        %551 = vmatprep.subr.mxu0 0.0
        %552 = vmatpush1.msra.mxu0 0.0
        %553 = vmatprep.subr.mxu0 0.0
        %554 = vmatpush1.msra.mxu0 0.0
        %555 = vmatprep.subr.mxu0 0.0
        %556 = vmatpush1.msra.mxu0 0.0
        %557 = vmatprep.subr.mxu0 0.0
        %558 = vmatpush1.msra.mxu0 0.0
        %559 = vmatprep.subr.mxu0 0.0
        %560 = vmatpush1.msra.mxu0 0.0
        %561 = vmatprep.subr.mxu0 0.0
        %562 = vmatpush1.msra.mxu0 0.0
        %563 = vmatprep.subr.mxu0 0.0
        %564 = vmatpush1.msra.mxu0 0.0
        %565 = vmatprep.subr.mxu0 0.0
        %566 = vmatpush1.msra.mxu0 0.0
        %567 = vmatprep.subr.mxu0 0.0
        %568 = vmatpush1.msra.mxu0 0.0
        %569 = vmatprep.subr.mxu0 0.0
        %570 = vmatpush1.msra.mxu0 0.0
        %571 = vmatprep.subr.mxu0 0.0
        %572 = vmatpush1.msra.mxu0 0.0
        %573 = vmatprep.subr.mxu0 0.0
        %574 = vmatpush1.msra.mxu0 0.0
        %575 = vmatprep.subr.mxu0 0.0
        %576 = vmatpush1.msra.mxu0 %v519
        %577 = vmatprep.subr.mxu0 0.0
        %578 = vmatpush2.msra.mxu0 0.0
        %579 = vmatprep.subr.mxu0 0.0
        %580 = vmatpush2.msra.mxu0 0.0
        %581 = vmatprep.subr.mxu0 0.0
        %582 = vmatpush2.msra.mxu0 0.0
        %583 = vmatprep.subr.mxu0 0.0
        %584 = vmatpush2.msra.mxu0 0.0
        %585 = vmatprep.subr.mxu0 0.0
        %586 = vmatpush2.msra.mxu0 0.0
        %587 = vmatprep.subr.mxu0 0.0
        %588 = vmatpush2.msra.mxu0 0.0
        %589 = vmatprep.subr.mxu0 0.0
        %590 = vmatpush2.msra.mxu0 0.0
        %591 = vmatprep.subr.mxu0 0.0
        %592 = vmatpush2.msra.mxu0 0.0
        %593 = vmatprep.subr.mxu0 0.0
        %594 = vmatpush2.msra.mxu0 0.0
        %595 = vmatprep.subr.mxu0 0.0
        %596 = vmatpush2.msra.mxu0 0.0
        %597 = vmatprep.subr.mxu0 0.0
        %598 = vmatpush2.msra.mxu0 0.0
        %599 = vmatprep.subr.mxu0 0.0
        %600 = vmatpush2.msra.mxu0 0.0
        %601 = vmatprep.subr.mxu0 0.0
        %602 = vmatpush2.msra.mxu0 0.0
        %603 = vmatprep.subr.mxu0 0.0
        %604 = vmatpush2.msra.mxu0 0.0
        %605 = vmatprep.subr.mxu0 0.0
        %606 = vmatpush2.msra.mxu0 0.0
        %607 = vmatprep.subr.mxu0 0.0
        %608 = vmatpush2.msra.mxu0 0.0
        %609 = vmatprep.mubr.f32.mxu0 0.0
        %610 = vmatmul.mubr.f32.gmra.mxu0 %v522
        %v611 = vpop.f32.mrf.mxu0
        %v612 = vadd.f32 0.0, %v611
        %v613 = vpop.f32.mrf.mxu0
        %614 = vmatprep.mubr.f32.mxu0 0.0
        %615 = vmatmul.mubr.f32.gmra.mxu0 %v525
        %v616 = vpop.f32.mrf.mxu0
        %v617 = vadd.f32 0.0, %v616
        %v618 = vpop.f32.mrf.mxu0
        %619 = vmatprep.mubr.f32.mxu0 0.0
        %620 = vmatmul.mubr.f32.gmra.mxu0 %v528
        %v621 = vpop.f32.mrf.mxu0
        %v622 = vadd.f32 0.0, %v621
        %v623 = vpop.f32.mrf.mxu0
        %624 = vmatprep.mubr.f32.mxu0 0.0
        %625 = vmatmul.mubr.f32.gmra.mxu0 %v531
        %v626 = vpop.f32.mrf.mxu0
        %v627 = vadd.f32 0.0, %v626
        %v628 = vpop.f32.mrf.mxu0
        %629 = vmatprep.mubr.f32.mxu0 0.0
        %630 = vmatmul.mubr.f32.gmra.mxu0 %v534
        %v631 = vpop.f32.mrf.mxu0
        %v632 = vadd.f32 0.0, %v631
        %v633 = vpop.f32.mrf.mxu0
        %634 = vmatprep.mubr.f32.mxu0 0.0
        %635 = vmatmul.mubr.f32.gmra.mxu0 %v537
        %v636 = vpop.f32.mrf.mxu0
        %v637 = vadd.f32 0.0, %v636
        %v638 = vpop.f32.mrf.mxu0
        %639 = vmatprep.mubr.f32.mxu0 0.0
        %640 = vmatmul.mubr.f32.gmra.mxu0 %v540
        %v641 = vpop.f32.mrf.mxu0
        %v642 = vadd.f32 0.0, %v641
        %v643 = vpop.f32.mrf.mxu0
        %644 = vmatprep.mubr.f32.mxu0 0.0
        %645 = vmatmul.mubr.f32.gmra.mxu0 %v543
        %v646 = vpop.f32.mrf.mxu0
        %v647 = vadd.f32 0.0, %v646
        %v648 = vpop.f32.mrf.mxu0
        %649 = vdwg.mxu0
        %v650 = vsel %vm212, %v202, 0.0
        %651 = vadd.xlane.f32.xlu0 %v650
        %v652 = vpop.xlane.xlu0 %651
        %v653 = vsel %vm212, %v203, 0.0
        %654 = vadd.xlane.f32.xlu0 %v653
        %v655 = vpop.xlane.xlu0 %654
        %v656 = vld [vmem:[%s2] sm:$0x1]
        %v658 = vlaneseq
        %v659 = vshrl.u32 %v658, 7
        %v660 = vsub.s32 0, %v659
        %v661 = vrot.slane %v656, %v660
        %v663 = vmul.f32 %v652, %v661
        %v664 = vmul.f32 %v655, %v661
        %v665 = vadd.f32 %v612, %v663
        %v666 = vadd.f32 %v617, %v664
        %v667 = vadd.f32 %v622, %v663
        %v668 = vadd.f32 %v627, %v664
        %v669 = vadd.f32 %v632, %v663
        %v670 = vadd.f32 %v637, %v664
        %v671 = vadd.f32 %v642, %v663
        %v672 = vadd.f32 %v647, %v664
        %v673 = vmax.f32 %v665, 0.0
        %v674 = vmax.f32 %v666, 0.0
        %v675 = vmax.f32 %v667, 0.0
        %v676 = vmax.f32 %v668, 0.0
        %v677 = vmax.f32 %v669, 0.0
        %v678 = vmax.f32 %v670, 0.0
        %v679 = vmax.f32 %v671, 0.0
        %v680 = vmax.f32 %v672, 0.0
        %vm681 = vcmask 261120
        %682 = vst.msk [vmem:[%s193] sm:$0xff] %vm681, %v673
        %683 = vst.msk [vmem:[%s193 + $0x8] sm:$0xff] %vm681, %v674
        %684 = vst.msk [vmem:[%s193 + $0x10] sm:$0xff] %vm681, %v675
        %685 = vst.msk [vmem:[%s193 + $0x18] sm:$0xff] %vm681, %v676
        %686 = vst.msk [vmem:[%s193 + $0x20] sm:$0xff] %vm681, %v677
        %687 = vst.msk [vmem:[%s193 + $0x28] sm:$0xff] %vm681, %v678
        %688 = vst.msk [vmem:[%s193 + $0x30] sm:$0xff] %vm681, %v679
        %689 = vst.msk [vmem:[%s193 + $0x38] sm:$0xff] %vm681, %v680
        %s690 = sand.u32 %s115, 1
        %s691 = scalar_lea.sflag [#allocation3], %s690
        %s692 = sand.u32 %s115, 1
        %s693 = smul.addr %s692, 64
        %s694 = scalar_lea.vmem [#allocation2], %s693
        // Predicated region
        $region37: #{tpu_custom_call.1} parent=35 // pred_check
          %p695 = pneg %p125
        $region38: #{tpu_custom_call.1} parent=35 // pred_check_branch
          %697 = sbr.rel (%p695) target = $region40
        $region39: #{tpu_custom_call.1} parent=35 // pred_region
          %s698 = smul.u32 4, %s18
          %s700 = ssub.s32 1024, 1024
          %701 = vsyncadd %s691, %s700
          %s702 = smul.addr %s698, 2
          %s703 = smul.addr %s702, 128
          %s704 = scalar_lea.hbm %s4, %s703
          %s705 = sshll.u32 %s694, 4
          %s706 = int_to_ptr.vmem [resolvable:$true] %s705
          %711 = dma.vmem_to_hbm [thread:$0]  %s706, 1024, %s704, %s691, 128, 128, 8
        $region40: #{tpu_custom_call.1} parent=35 // pred_fallthru
          _
      $region36: #{tpu_custom_call.1} parent=5 // pred_fallthru
        _
      %p712 = scmp.le.s32.totalorder 2, %s13
      // Predicated region
      $region41: #{tpu_custom_call.1} parent=5 // pred_check
        %p713 = pneg %p712
      $region42: #{tpu_custom_call.1} parent=5 // pred_check_branch
        %715 = sbr.rel (%p713) target = $region44
      $region43: #{tpu_custom_call.1} parent=5 // pred_region
        %s716 = ssub.s32 %s13, 2
        // Predicated region
        $region45: #{tpu_custom_call.1} parent=43 // pred_check
          %p717 = pneg %p131
        $region46: #{tpu_custom_call.1} parent=43 // pred_check_branch
          %719 = sbr.rel (%p717) target = $region48
        $region47: #{tpu_custom_call.1} parent=43 // pred_region
          %s720 = sand.u32 %s116, 1
          %s721 = scalar_lea.sflag [#allocation3], %s720
          %s722 = sand.u32 %s116, 1
          %s723 = smul.addr %s722, 64
          %s724 = scalar_lea.vmem [#allocation2], %s723
          %725 = dma.done %s721, 1024
        $region48: #{tpu_custom_call.1} parent=43 // pred_fallthru
          _
      $region44: #{tpu_custom_call.1} parent=5 // pred_fallthru
        _
    $region6: #{tpu_custom_call.1} parent=1 // loop_footer
      %s17 = sadd.s32 1, %s13
    $region7: #{tpu_custom_call.1} parent=1 // loop_footer_branch
      %12 = sbr.rel target = $region3
    $region8: #{tpu_custom_call.1} parent=1 // loop_exit
      _
    %726 = vsyncpa [#allocation3], 1
    %s727 = scalar_lea.sflag [#allocation3], 1
    %728 = vsyncpa %s727, 1

</llo_original>
